<compile_context>
chip_gen: v6e
topology: v6e:2x2x1
jax: 0.10.0
libtpu: 0.0.40
codegen_flags: <defaults>
</compile_context>

<pallas_src>
import math

import jax
import jax.numpy as jnp
from jax import lax
from jax.experimental import pallas as pl
from jax.experimental.pallas import tpu as pltpu


# ----------------------------- kernels -------------------------------------


def _hyper_linear_bias_kernel(x_ref, w_ref, b_ref, o_ref, acc_ref):
    # x_ref: (tm, tk)   w_ref: (tn, tk) native (O, K) layout   b_ref: (1, tn) f32
    # o_ref: (tm, tn)   acc_ref: (tm, tn) f32 scratch
    k = pl.program_id(2)

    @pl.when(k == 0)
    def _():
        # Seed the accumulator with the bias: no zero-store, no epilogue add.
        acc_ref[...] = jnp.broadcast_to(b_ref[...], acc_ref.shape)

    acc_ref[...] += lax.dot_general(
        x_ref[...],
        w_ref[...],
        dimension_numbers=(((1,), (1,)), ((), ())),  # contract K with K (RHS transposed)
        preferred_element_type=jnp.float32,
    )

    @pl.when(k == pl.num_programs(2) - 1)
    def _():
        o_ref[...] = acc_ref[...].astype(o_ref.dtype)


def _hyper_linear_nobias_kernel(x_ref, w_ref, o_ref, acc_ref):
    k = pl.program_id(2)

    @pl.when(k == 0)
    def _():
        acc_ref[...] = jnp.zeros_like(acc_ref)

    acc_ref[...] += lax.dot_general(
        x_ref[...],
        w_ref[...],
        dimension_numbers=(((1,), (1,)), ((), ())),
        preferred_element_type=jnp.float32,
    )

    @pl.when(k == pl.num_programs(2) - 1)
    def _():
        o_ref[...] = acc_ref[...].astype(o_ref.dtype)


# ----------------------------- helpers --------------------------------------


def _round_up(v, m):
    return ((v + m - 1) // m) * m


def _pick_tile(dim_pad, cap, base):
    """Largest multiple of `base` that is <= cap and divides dim_pad."""
    cap = max(base, (min(cap, dim_pad) // base) * base)
    t = cap
    while t > base and dim_pad % t != 0:
        t -= base
    return t


# ----------------------------- wrapper --------------------------------------


def hyper_linear(x, hypernetwork_weights, input_dim, output_dim, bias=True,
                 compute_dtype=None):
    """JAX/Pallas equivalent of HyperLinear.forward."""
    # --- glue (plain JAX): slice the flat hypernetwork weight vector ---
    n_w = input_dim * output_dim
    w = hypernetwork_weights[:n_w].reshape(output_dim, input_dim)  # native (O, K)
    b = hypernetwork_weights[n_w:n_w + output_dim] if bias else None

    out_dtype = jnp.promote_types(x.dtype, hypernetwork_weights.dtype)
    compute_dt = jnp.dtype(compute_dtype) if compute_dtype is not None else jnp.dtype(out_dtype)

    lead_shape = x.shape[:-1]
    M = math.prod(lead_shape) if lead_shape else 1
    x2d = x.reshape(M, input_dim)

    # --- small-shape fast path: XLA's fused dot beats pad + pallas launch ---
    if M < 8 or input_dim < 128 or output_dim < 128:
        y = jnp.dot(x2d.astype(out_dtype), w.T.astype(out_dtype),
                    preferred_element_type=jnp.float32)
        if bias:
            y = y + b.astype(jnp.float32)
        return y.astype(out_dtype).reshape(*lead_shape, output_dim)

    # --- layout bases & minimal padding (waste never exceeds 127 elems) ---
    compute_itemsize = jnp.dtype(compute_dt).itemsize
    out_itemsize = jnp.dtype(out_dtype).itemsize
    m_base = 16 if compute_itemsize == 2 else 8   # (16,128) sublane tiling for bf16

    M_pad = _round_up(M, m_base)
    K_pad = _round_up(input_dim, 128)
    O_pad = _round_up(output_dim, 128)

    # --- tile sizes: big (HBM reuse), but always divisors of the padded dims ---
    tm = _pick_tile(M_pad, 512, m_base)
    tn = _pick_tile(O_pad, 1024, 128)
    tk = _pick_tile(K_pad, 1024, 128)

    # Megacore: make sure both TensorCores get work on the parallel axes.
    if (M_pad // tm) * (O_pad // tn) == 1:
        if O_pad // 128 >= 2:
            tn = _pick_tile(O_pad, max(128, tn // 2), 128)
        elif M_pad // m_base >= 2:
            tm = _pick_tile(M_pad, max(m_base, tm // 2), m_base)

    grid_m, grid_n, grid_k = M_pad // tm, O_pad // tn, K_pad // tk
    grid = (grid_m, grid_n, grid_k)

    # --- cast to compute dtype, then zero-pad (pad is at most 127/dim) ---
    x2d = x2d.astype(compute_dt)
    w = w.astype(compute_dt)
    if (M_pad, K_pad) != (M, input_dim):
        x2d = jnp.pad(x2d, ((0, M_pad - M), (0, K_pad - input_dim)))
    if (O_pad, K_pad) != (output_dim, input_dim):
        w = jnp.pad(w, ((0, O_pad - output_dim), (0, K_pad - input_dim)))

    # --- VMEM budget (double-buffered inputs/outputs + f32 accumulator) ---
    vmem_needed = (
        2 * tm * tk * compute_itemsize      # x double-buffer
        + 2 * tn * tk * compute_itemsize    # w double-buffer
        + 2 * tm * tn * out_itemsize        # out double-buffer
        + tm * tn * 4                       # f32 accumulator scratch
        + 2 * tn * 4                        # bias double-buffer
    )
    vmem_limit = int(min(56 << 20, max(32 << 20, 2 * vmem_needed)))

    # --- cost estimate including grid re-reads ---
    cost = pl.CostEstimate(
        flops=2 * M_pad * K_pad * O_pad,
        transcendentals=0,
        bytes_accessed=(
            grid_n * M_pad * K_pad * compute_itemsize   # x re-read per N tile
            + grid_m * O_pad * K_pad * compute_itemsize  # w re-read per M tile
            + (grid_m * O_pad * 4 if bias else 0)        # bias
            + M_pad * O_pad * out_itemsize               # out
        ),
    )

    compiler_params = pltpu.CompilerParams(
        dimension_semantics=("parallel", "parallel", "arbitrary"),
        vmem_limit_bytes=vmem_limit,
    )

    x_spec = pl.BlockSpec((tm, tk), lambda i, j, k: (i, k))
    w_spec = pl.BlockSpec((tn, tk), lambda i, j, k: (j, k))   # native (O, K) layout
    out_spec = pl.BlockSpec((tm, tn), lambda i, j, k: (i, j))
    scratch = [pltpu.VMEM((tm, tn), jnp.float32)]

    if bias:
        b2d = jnp.pad(b.astype(jnp.float32), (0, O_pad - output_dim)).reshape(1, O_pad)
        out2d = pl.pallas_call(
            _hyper_linear_bias_kernel,
            out_shape=jax.ShapeDtypeStruct((M_pad, O_pad), out_dtype),
            grid_spec=pltpu.PrefetchScalarGridSpec(
                num_scalar_prefetch=0,
                grid=grid,
                in_specs=[
                    x_spec,
                    w_spec,
                    pl.BlockSpec((1, tn), lambda i, j, k: (0, j)),
                ],
                out_specs=out_spec,
                scratch_shapes=scratch,
            ),
            compiler_params=compiler_params,
            cost_estimate=cost,
        )(x2d, w, b2d)
    else:
        out2d = pl.pallas_call(
            _hyper_linear_nobias_kernel,
            out_shape=jax.ShapeDtypeStruct((M_pad, O_pad), out_dtype),
            grid_spec=pltpu.PrefetchScalarGridSpec(
                num_scalar_prefetch=0,
                grid=grid,
                in_specs=[x_spec, w_spec],
                out_specs=out_spec,
                scratch_shapes=scratch,
            ),
            compiler_params=compiler_params,
            cost_estimate=cost,
        )(x2d, w)

    out2d = out2d[:M, :output_dim]
    return out2d.reshape(*lead_shape, output_dim)


# ----------------------------- demo / check ---------------------------------


if __name__ == "__main__":
    key = jax.random.PRNGKey(0)
    k1, k2, k3, k4 = jax.random.split(key, 4)

    # ---- Case 1: tiny module-like shapes (batch=2, seq=8, 32 -> 16) -------
    # Takes the small-shape fast path (Pallas padding/launch would dwarf work).
    batch, seq = 2, 8
    in_dim, out_dim = 32, 16
    n_params = in_dim * out_dim + out_dim
    x_small = jax.random.normal(k1, (batch, seq, in_dim), dtype=jnp.float32)
    hw_small = jax.random.normal(k2, (n_params,), dtype=jnp.float32) * 0.1

    y_small = jax.block_until_ready(
        hyper_linear(x_small, hw_small, in_dim, out_dim, bias=True))
    w_ref = hw_small[: in_dim * out_dim].reshape(out_dim, in_dim)
    b_ref = hw_small[in_dim * out_dim:]
    y_small_ref = x_small @ w_ref.T + b_ref
    assert y_small.shape == (batch, seq, out_dim)
    assert jnp.allclose(y_small, y_small_ref, atol=1e-5, rtol=1e-5)

    # ---- Case 2: shapes that exercise the Pallas kernel (f32 path) --------
    batch2, seq2 = 2, 64
    in2, out2 = 256, 384
    n_params2 = in2 * out2 + out2
    x_big = jax.random.normal(k3, (batch2, seq2, in2), dtype=jnp.float32)
    hw_big = jax.random.normal(k4, (n_params2,), dtype=jnp.float32) * 0.05

    y_big = jax.block_until_ready(
        hyper_linear(x_big, hw_big, in2, out2, bias=True))
    w2 = hw_big[: in2 * out2].reshape(out2, in2)
    b2 = hw_big[in2 * out2:]
    y_big_ref = x_big @ w2.T + b2
    assert y_big.shape == (batch2, seq2, out2)
    assert jnp.allclose(y_big, y_big_ref, atol=1e-4, rtol=1e-4)

    # ---- Case 3: bf16 MXU operands, f32 accumulation (looser tolerance) ---
    y_bf16 = jax.block_until_ready(
        hyper_linear(x_big, hw_big, in2, out2, bias=True,
                     compute_dtype=jnp.bfloat16))
    assert y_bf16.shape == (batch2, seq2, out2)
    assert float(jnp.max(jnp.abs(y_bf16.astype(jnp.float32) - y_big_ref))) < 0.1

    print("KERNEL_OK")
</pallas_src>

<mosaic_0001>
module attributes {stable_mosaic.version = 11 : i64} {
  func.func @_hyper_linear_bias_kernel(%arg0: i32, %arg1: i32, %arg2: i32, %arg3: memref<128x256xf32, #tpu.memory_space<vmem>>, %arg4: memref<128x256xf32, #tpu.memory_space<vmem>>, %arg5: memref<1x128xf32, #tpu.memory_space<vmem>>, %arg6: memref<128x128xf32, #tpu.memory_space<vmem>>, %arg7: memref<128x128xf32, #tpu.memory_space<vmem>>) attributes {dimension_semantics = [#tpu.dimension_semantics<parallel>, #tpu.dimension_semantics<parallel>, #tpu.dimension_semantics<arbitrary>], iteration_bounds = array<i64: 1, 3, 1>, scalar_prefetch = 0 : i64, scratch_operands = 1 : i64, tpu.core_type = #tpu.core_type<tc>, window_params = [{transform_indices = @transform_0, window_bounds = array<i64: 128, 256>}, {transform_indices = @transform_1, window_bounds = array<i64: 128, 256>}, {transform_indices = @transform_2, window_bounds = array<i64: 1, 128>}, {transform_indices = @transform_3, window_bounds = array<i64: 128, 128>}]} {
    %c0_i32 = arith.constant 0 : i32
    %0 = arith.cmpi eq, %arg2, %c0_i32 : i32
    %1 = arith.extui %0 : i1 to i32
    %c0_i32_0 = arith.constant 0 : i32
    %2 = arith.cmpi ne, %1, %c0_i32_0 : i32
    scf.if %2 {
      %c0_10 = arith.constant 0 : index
      %c0_11 = arith.constant 0 : index
      %12 = vector.load %arg5[%c0_10, %c0_11] : memref<1x128xf32, #tpu.memory_space<vmem>>, vector<1x128xf32>
      %13 = vector.shape_cast %12 : vector<1x128xf32> to vector<1x128xf32>
      %14 = vector.broadcast %13 : vector<1x128xf32> to vector<128x128xf32>
      %c0_12 = arith.constant 0 : index
      %c0_13 = arith.constant 0 : index
      %15 = vector.load %arg7[%c0_12, %c0_13] : memref<128x128xf32, #tpu.memory_space<vmem>>, vector<128x128xf32>
      tpu.vector_store %arg7[%c0_12, %c0_13], %14 {strides = array<i32>} : memref<128x128xf32, #tpu.memory_space<vmem>>, vector<128x128xf32>,
    } else {
    }
    %c0 = arith.constant 0 : index
    %c0_1 = arith.constant 0 : index
    %3 = vector.load %arg7[%c0, %c0_1] : memref<128x128xf32, #tpu.memory_space<vmem>>, vector<128x128xf32>
    %c0_2 = arith.constant 0 : index
    %c0_3 = arith.constant 0 : index
    %4 = vector.load %arg3[%c0_2, %c0_3] : memref<128x256xf32, #tpu.memory_space<vmem>>, vector<128x256xf32>
    %c0_4 = arith.constant 0 : index
    %c0_5 = arith.constant 0 : index
    %5 = vector.load %arg4[%c0_4, %c0_5] : memref<128x256xf32, #tpu.memory_space<vmem>>, vector<128x256xf32>
    %cst = arith.constant dense<0.000000e+00> : vector<128x128xf32>
    %6 = tpu.matmul %4, %5, %cst {dimension_numbers = #tpu.dot_dimension_numbers<[1], [1], [0], [0], [0, 0, 1, 0], [], []>} : vector<128x256xf32>, vector<128x256xf32>, vector<128x128xf32> -> vector<128x128xf32>
    %7 = arith.addf %3, %6 : vector<128x128xf32>
    %c0_6 = arith.constant 0 : index
    %c0_7 = arith.constant 0 : index
    %8 = vector.load %arg7[%c0_6, %c0_7] : memref<128x128xf32, #tpu.memory_space<vmem>>, vector<128x128xf32>
    tpu.vector_store %arg7[%c0_6, %c0_7], %7 {strides = array<i32>} : memref<128x128xf32, #tpu.memory_space<vmem>>, vector<128x128xf32>,
    %c0_i32_8 = arith.constant 0 : i32
    %9 = arith.cmpi eq, %arg2, %c0_i32_8 : i32
    %10 = arith.extui %9 : i1 to i32
    %c0_i32_9 = arith.constant 0 : i32
    %11 = arith.cmpi ne, %10, %c0_i32_9 : i32
    scf.if %11 {
      %c0_10 = arith.constant 0 : index
      %c0_11 = arith.constant 0 : index
      %12 = vector.load %arg7[%c0_10, %c0_11] : memref<128x128xf32, #tpu.memory_space<vmem>>, vector<128x128xf32>
      %c0_12 = arith.constant 0 : index
      %c0_13 = arith.constant 0 : index
      %13 = vector.load %arg6[%c0_12, %c0_13] : memref<128x128xf32, #tpu.memory_space<vmem>>, vector<128x128xf32>
      tpu.vector_store %arg6[%c0_12, %c0_13], %12 {strides = array<i32>} : memref<128x128xf32, #tpu.memory_space<vmem>>, vector<128x128xf32>,
    } else {
    }
    return
  }
  func.func @transform_0(%arg0: i32, %arg1: i32, %arg2: i32) -> (i32, i32) {
    %c0_i32 = arith.constant 0 : i32
    return %arg0, %arg2 : i32, i32
  }
  func.func @transform_1(%arg0: i32, %arg1: i32, %arg2: i32) -> (i32, i32) {
    %c0_i32 = arith.constant 0 : i32
    return %arg1, %arg2 : i32, i32
  }
  func.func @transform_2(%arg0: i32, %arg1: i32, %arg2: i32) -> (i32, i32) {
    %c0_i32 = arith.constant 0 : i32
    %c0_i32_0 = arith.constant 0 : i32
    return %c0_i32, %arg1 : i32, i32
  }
  func.func @transform_3(%arg0: i32, %arg1: i32, %arg2: i32) -> (i32, i32) {
    %c0_i32 = arith.constant 0 : i32
    return %arg0, %arg1 : i32, i32
  }
}

</mosaic_0001>

<llo_original>
// kernel: tpu_custom_call.1
$region0: #{tpu_custom_call.1}
  #allocation0 [shape = 'u32[]', space=smem, size = 0x4, offset = 0x4, fixed_abs, tag = 'smem constant byte address 0x4 - core index']
  #allocation1 [shape = 'u32[144,128]{1,0:T(1,128)}', space=vmem, size = 0x12000, scoped, tag = 'internal scratch']
  #allocation2 [shape = 'f32[128,128]{1,0:T(8,128)}', space=vmem, size = 0x10000, scoped, tag = 'scratch operand']
  %s0 = inlined_call_operand.hbm [shape: f32[128,256], index: 0, kind: input, shape index: {}]
  %s1 = inlined_call_operand.hbm [shape: f32[384,256], index: 1, kind: input, shape index: {}]
  %s2 = inlined_call_operand.vmem [shape: f32[1,384], index: 2, kind: input, shape index: {}]
  %s3 = inlined_call_operand.hbm [shape: f32[128,384], index: 3, kind: output, shape index: {}]
  %s4 = sld [smem:[#allocation0]]
  $region61: #{tpu_custom_call.1} parent=0
    _
  %s6 = ssub.s32 1, %s4
  %s7 = scalar_select 0, %s6, %s4
  $region1: #{tpu_custom_call.1} parent=0
    #allocation3 [shape = 'u8[131072]{0}', space=vmem, size = 0x20000, scoped, tag = 'input window, operand 0, single buffered']
    #allocation4 [shape = 's32[2]{0}', space=sflag, size = 0x8, scoped, tag = 'scoped memory for tpu_custom_call.1']
    #allocation5 [shape = 's32[2]{0}', space=sflag, size = 0x8, scoped, tag = 'scoped memory for tpu_custom_call.1']
    #allocation6 [shape = 'u8[262144]{0}', space=vmem, size = 0x40000, scoped, tag = 'input window, operand 1']
    #allocation7 [shape = 's32[2]{0}', space=sflag, size = 0x8, scoped, tag = 'scoped memory for tpu_custom_call.1']
    #allocation8 [shape = 'u8[131072]{0}', space=vmem, size = 0x20000, scoped, tag = 'output window, operand 0']
    %8 = vsyncpa [#allocation4], 0
    %9 = vsyncpa [#allocation7], 0
    %s10 = scalar_lea.sflag [#allocation7], 1
    %11 = vsyncpa %s10, 0
    %12 = vsyncpa [#allocation5], 0
    %s13 = scalar_lea.sflag [#allocation5], 1
    %14 = vsyncpa %s13, 0
    loop: start=0, step=1, limit=5
    $region2: #{tpu_custom_call.1} parent=1 // loop_pre_header
      _
    $region3: #{tpu_custom_call.1} parent=1 // loop_header
      %s16 = sphi 0, %s20
      %p17 = scmp.ge.s32.totalorder %s16, 5
      %s23 = sphi 0, %s42
      %s24 = sphi 0, %s38
      %s25 = sphi 0, %s34
      %s26 = sphi 0, %s23
      %s27 = sphi 0, %s24
      %s28 = sphi 0, %s25
      %s29 = sphi 0, %s26
      %s30 = sphi 0, %s27
      %s31 = sphi 0, %s28
      %s47 = sphi 0, %s49
      %s50 = sphi 0, %s47
      %s51 = sphi 0, %s50
      %s67 = sphi 0, %s51
      %s75 = sphi 0, %s77
      %s78 = sphi 0, %s75
      %s79 = sphi 0, %s78
      %s95 = sphi 0, %s79
      %s101 = sphi 0, %s103
      %s104 = sphi 0, %s101
      %s105 = sphi 0, %s104
      %s121 = sphi 0, %s105
      %s129 = sphi 0, %s131
      %s132 = sphi 0, %s129
      %s133 = sphi 0, %s132
      %s149 = sphi 0, %s133
    $region4: #{tpu_custom_call.1} parent=1 // loop_header_branch
      %19 = sbr.rel (%p17) target = $region8
    $region5: #{tpu_custom_call.1} parent=1 // loop_body
      %s21 = ssub.s32 %s16, 1
      %s22 = ssub.s32 %s16, 2
      %s32 = sadd.s32 1, %s25
      %p33 = scmp.ge.s32.totalorder %s32, 1
      %s34 = scalar_select %p33, 0, %s32
      %s35 = sadd.s32 1, %s24
      %s36 = scalar_select %p33, %s35, %s24
      %p37 = scmp.ge.s32.totalorder %s36, 3
      %s38 = scalar_select %p37, 0, %s36
      %s39 = sadd.s32 1, %s23
      %s40 = scalar_select %p37, %s39, %s23
      %p41 = scmp.ge.s32.totalorder %s40, 1
      %s42 = scalar_select %p41, 0, %s40
      %s43 = ssub.s32 %s23, %s42
      %s44 = ssub.s32 %s25, %s34
      %s45 = sor.u32 %s43, %s44
      %p46 = scmp.eq.s32.totalorder %s45, 0
      %s48 = sadd.s32 %s47, 1
      %s49 = scalar_select %p46, %s47, %s48
      %p52 = pneg %p46
      %p53 = scmp.eq.s32.totalorder %s16, 2
      %p54 = por %p52, %p53
      %p55 = scmp.ne.s32.totalorder %s47, %s50
      %p56 = scmp.eq.s32.totalorder %s16, 0
      %p57 = por %p55, %p56
      %p58 = scmp.ne.s32.totalorder %s47, %s50
      %p59 = scmp.eq.s32.totalorder %s21, 2
      %p60 = por %p58, %p59
      %p61 = scmp.ne.s32.totalorder %s50, %s51
      %p62 = scmp.eq.s32.totalorder %s21, 0
      %p63 = por %p61, %p62
      %p64 = scmp.ne.s32.totalorder %s50, %s51
      %p65 = scmp.eq.s32.totalorder %s22, 2
      %p66 = por %p64, %p65
      %p68 = scmp.ne.s32.totalorder %s51, %s67
      %p69 = scmp.eq.s32.totalorder %s22, 0
      %p70 = por %p68, %p69
      %s71 = ssub.s32 %s24, %s38
      %s72 = ssub.s32 %s25, %s34
      %s73 = sor.u32 %s71, %s72
      %p74 = scmp.eq.s32.totalorder %s73, 0
      %s76 = sadd.s32 %s75, 1
      %s77 = scalar_select %p74, %s75, %s76
      %p80 = pneg %p74
      %p81 = scmp.eq.s32.totalorder %s16, 2
      %p82 = por %p80, %p81
      %p83 = scmp.ne.s32.totalorder %s75, %s78
      %p84 = scmp.eq.s32.totalorder %s16, 0
      %p85 = por %p83, %p84
      %p86 = scmp.ne.s32.totalorder %s75, %s78
      %p87 = scmp.eq.s32.totalorder %s21, 2
      %p88 = por %p86, %p87
      %p89 = scmp.ne.s32.totalorder %s78, %s79
      %p90 = scmp.eq.s32.totalorder %s21, 0
      %p91 = por %p89, %p90
      %p92 = scmp.ne.s32.totalorder %s78, %s79
      %p93 = scmp.eq.s32.totalorder %s22, 2
      %p94 = por %p92, %p93
      %p96 = scmp.ne.s32.totalorder %s79, %s95
      %p97 = scmp.eq.s32.totalorder %s22, 0
      %p98 = por %p96, %p97
      %s99 = ssub.s32 %s24, %s38
      %p100 = scmp.eq.s32.totalorder %s99, 0
      %s102 = sadd.s32 %s101, 1
      %s103 = scalar_select %p100, %s101, %s102
      %p106 = pneg %p100
      %p107 = scmp.eq.s32.totalorder %s16, 2
      %p108 = por %p106, %p107
      %p109 = scmp.ne.s32.totalorder %s101, %s104
      %p110 = scmp.eq.s32.totalorder %s16, 0
      %p111 = por %p109, %p110
      %p112 = scmp.ne.s32.totalorder %s101, %s104
      %p113 = scmp.eq.s32.totalorder %s21, 2
      %p114 = por %p112, %p113
      %p115 = scmp.ne.s32.totalorder %s104, %s105
      %p116 = scmp.eq.s32.totalorder %s21, 0
      %p117 = por %p115, %p116
      %p118 = scmp.ne.s32.totalorder %s104, %s105
      %p119 = scmp.eq.s32.totalorder %s22, 2
      %p120 = por %p118, %p119
      %p122 = scmp.ne.s32.totalorder %s105, %s121
      %p123 = scmp.eq.s32.totalorder %s22, 0
      %p124 = por %p122, %p123
      %s125 = ssub.s32 %s23, %s42
      %s126 = ssub.s32 %s24, %s38
      %s127 = sor.u32 %s125, %s126
      %p128 = scmp.eq.s32.totalorder %s127, 0
      %s130 = sadd.s32 %s129, 1
      %s131 = scalar_select %p128, %s129, %s130
      %p134 = pneg %p128
      %p135 = scmp.eq.s32.totalorder %s16, 2
      %p136 = por %p134, %p135
      %p137 = scmp.ne.s32.totalorder %s129, %s132
      %p138 = scmp.eq.s32.totalorder %s16, 0
      %p139 = por %p137, %p138
      %p140 = scmp.ne.s32.totalorder %s129, %s132
      %p141 = scmp.eq.s32.totalorder %s21, 2
      %p142 = por %p140, %p141
      %p143 = scmp.ne.s32.totalorder %s132, %s133
      %p144 = scmp.eq.s32.totalorder %s21, 0
      %p145 = por %p143, %p144
      %p146 = scmp.ne.s32.totalorder %s132, %s133
      %p147 = scmp.eq.s32.totalorder %s22, 2
      %p148 = por %p146, %p147
      %p150 = scmp.ne.s32.totalorder %s133, %s149
      %p151 = scmp.eq.s32.totalorder %s22, 0
      %p152 = por %p150, %p151
      %p153 = scmp.le.s32.totalorder 1, %s16
      %p154 = scmp.lt.s32.totalorder %s16, 4
      %p155 = pnand %p153, %p154
      %p156 = pneg %p155
      // Predicated region
      $region9: #{tpu_custom_call.1} parent=5 // pred_check
        _
      $region10: #{tpu_custom_call.1} parent=5 // pred_check_branch
        %158 = sbr.rel (%p155) target = $region12
      $region11: #{tpu_custom_call.1} parent=5 // pred_region
        %s159 = ssub.s32 %s16, 1
        // Predicated region
        $region13: #{tpu_custom_call.1} parent=11 // pred_check
          %p160 = pneg %p63
        $region14: #{tpu_custom_call.1} parent=11 // pred_check_branch
          %162 = sbr.rel (%p160) target = $region16
        $region15: #{tpu_custom_call.1} parent=11 // pred_region
          %s163 = smul.u32 16, %s26
          %s164 = smul.u32 2, %s28
          %s166 = ssub.s32 4096, 4096
          %167 = vsyncadd [#allocation4], %s166
          %s168 = smul.addr %s163, 2
          %s169 = sadd.s32 %s164, %s168
          %s170 = smul.addr %s169, 128
          %s171 = scalar_lea.hbm %s0, %s170
          %s172 = sshll.u32 [#allocation3], 4
          %s173 = int_to_ptr.vmem [resolvable:$true] %s172
          %178 = dma.hbm_to_vmem [thread:$0]  %s171, 4096, %s173, [#allocation4], 256, 256, 16
        $region16: #{tpu_custom_call.1} parent=11 // pred_fallthru
          _
      $region12: #{tpu_custom_call.1} parent=5 // pred_fallthru
        _
      %p179 = scmp.lt.s32.totalorder %s16, 3
      // Predicated region
      $region17: #{tpu_custom_call.1} parent=5 // pred_check
        %p180 = pneg %p179
      $region18: #{tpu_custom_call.1} parent=5 // pred_check_branch
        %182 = sbr.rel (%p180) target = $region20
      $region19: #{tpu_custom_call.1} parent=5 // pred_region
        // Predicated region
        $region21: #{tpu_custom_call.1} parent=19 // pred_check
          %p183 = pneg %p85
        $region22: #{tpu_custom_call.1} parent=19 // pred_check_branch
          %185 = sbr.rel (%p183) target = $region24
        $region23: #{tpu_custom_call.1} parent=19 // pred_region
          %s186 = sand.u32 %s75, 1
          %s187 = scalar_lea.sflag [#allocation7], %s186
          %s188 = sand.u32 %s75, 1
          %s189 = smul.addr %s188, 256
          %s190 = scalar_lea.vmem [#allocation6], %s189
          %s191 = smul.u32 16, %s24
          %s192 = smul.u32 2, %s25
          %s194 = ssub.s32 4096, 4096
          %195 = vsyncadd %s187, %s194
          %s196 = smul.addr %s191, 2
          %s197 = sadd.s32 %s192, %s196
          %s198 = smul.addr %s197, 128
          %s199 = scalar_lea.hbm %s1, %s198
          %s200 = sshll.u32 %s190, 4
          %s201 = int_to_ptr.vmem [resolvable:$true] %s200
          %206 = dma.hbm_to_vmem [thread:$0]  %s199, 4096, %s201, %s187, 256, 256, 16
        $region24: #{tpu_custom_call.1} parent=19 // pred_fallthru
          _
        // Predicated region
        $region25: #{tpu_custom_call.1} parent=19 // pred_check
          %p207 = pneg %p111
        $region26: #{tpu_custom_call.1} parent=19 // pred_check_branch
          %209 = sbr.rel (%p207) target = $region28
        $region27: #{tpu_custom_call.1} parent=19 // pred_region
          %p210 = scmp.lt.s32.totalorder %s24, 2
          %s211 = scalar_select %p210, %s24, 2
          %s212 = scalar_lea.vmem %s2, %s211
        $region28: #{tpu_custom_call.1} parent=19 // pred_fallthru
          _
      $region20: #{tpu_custom_call.1} parent=5 // pred_fallthru
        _
      %p213 = scmp.le.s32.totalorder 1, %s16
      %p214 = scmp.lt.s32.totalorder %s16, 4
      %p215 = pnand %p213, %p214
      %p216 = pneg %p215
      // Predicated region
      $region29: #{tpu_custom_call.1} parent=5 // pred_check
        _
      $region30: #{tpu_custom_call.1} parent=5 // pred_check_branch
        %218 = sbr.rel (%p215) target = $region32
      $region31: #{tpu_custom_call.1} parent=5 // pred_region
        %s219 = ssub.s32 %s16, 1
        // Predicated region
        $region33: #{tpu_custom_call.1} parent=31 // pred_check
          %p220 = pneg %p63
        $region34: #{tpu_custom_call.1} parent=31 // pred_check_branch
          %222 = sbr.rel (%p220) target = $region36
        $region35: #{tpu_custom_call.1} parent=31 // pred_region
          %223 = dma.done [#allocation4], 4096
        $region36: #{tpu_custom_call.1} parent=31 // pred_fallthru
          _
        %s224 = sand.u32 %s78, 1
        %s225 = scalar_lea.sflag [#allocation7], %s224
        %s226 = sand.u32 %s78, 1
        %s227 = smul.addr %s226, 256
        %s228 = scalar_lea.vmem [#allocation6], %s227
        // Predicated region
        $region37: #{tpu_custom_call.1} parent=31 // pred_check
          %p229 = pneg %p91
        $region38: #{tpu_custom_call.1} parent=31 // pred_check_branch
          %231 = sbr.rel (%p229) target = $region40
        $region39: #{tpu_custom_call.1} parent=31 // pred_region
          %232 = dma.done %s225, 4096
        $region40: #{tpu_custom_call.1} parent=31 // pred_fallthru
          _
        %p233 = pneg %p63
        %p234 = pneg %p60
        %s235 = sand.u32 %s78, 1
        %s236 = scalar_lea.sflag [#allocation7], %s235
        %s237 = sand.u32 %s78, 1
        %s238 = smul.addr %s237, 256
        %s239 = scalar_lea.vmem [#allocation6], %s238
        %p240 = pneg %p91
        %p241 = pneg %p88
        %p242 = scmp.lt.s32.totalorder %s27, 2
        %s243 = scalar_select %p242, %s27, 2
        %s244 = scalar_lea.vmem %s2, %s243
        %p245 = pneg %p117
        %p246 = pneg %p114
        %p247 = pneg %p145
        %p248 = pneg %p142
        %s249 = sand.u32 %s132, 1
        %s250 = scalar_lea.sflag [#allocation5], %s249
        %s251 = sand.u32 %s132, 1
        %s252 = smul.addr %s251, 128
        %s253 = scalar_lea.vmem [#allocation8], %s252
        %s254 = smul.u32 16, %s26
        %s255 = smul.u32 2, %s28
        %s256 = smul.u32 16, %s27
        %s257 = smul.u32 2, %s28
        %p258 = scmp.lt.s32.totalorder %s27, 2
        %s259 = scalar_select %p258, %s27, 2
        %s260 = scalar_lea.vmem %s2, %s259
        %s261 = smul.u32 16, %s26
        %p262 = scmp.eq.s32.totalorder %s28, 0
        // Predicated region
        $region41: #{tpu_custom_call.1} parent=31 // pred_check
          %p263 = pneg %p262
        $region42: #{tpu_custom_call.1} parent=31 // pred_check_branch
          %265 = sbr.rel (%p263) target = $region44
        $region43: #{tpu_custom_call.1} parent=31 // pred_region
          %v266 = vld [vmem:[%s260] sm:$0x1]
          %v268 = vlaneseq
          %v269 = vshrl.u32 %v268, 7
          %v270 = vsub.s32 0, %v269
          %v271 = vrot.slane %v266, %v270
          %273 = vst [vmem:[#allocation2] sm:$0xff] %v271
          %274 = vst [vmem:[#allocation2 + $0x8] sm:$0xff] %v271
          %275 = vst [vmem:[#allocation2 + $0x10] sm:$0xff] %v271
          %276 = vst [vmem:[#allocation2 + $0x18] sm:$0xff] %v271
          %277 = vst [vmem:[#allocation2 + $0x20] sm:$0xff] %v271
          %278 = vst [vmem:[#allocation2 + $0x28] sm:$0xff] %v271
          %279 = vst [vmem:[#allocation2 + $0x30] sm:$0xff] %v271
          %280 = vst [vmem:[#allocation2 + $0x38] sm:$0xff] %v271
          %281 = vst [vmem:[#allocation2 + $0x40] sm:$0xff] %v271
          %282 = vst [vmem:[#allocation2 + $0x48] sm:$0xff] %v271
          %283 = vst [vmem:[#allocation2 + $0x50] sm:$0xff] %v271
          %284 = vst [vmem:[#allocation2 + $0x58] sm:$0xff] %v271
          %285 = vst [vmem:[#allocation2 + $0x60] sm:$0xff] %v271
          %286 = vst [vmem:[#allocation2 + $0x68] sm:$0xff] %v271
          %287 = vst [vmem:[#allocation2 + $0x70] sm:$0xff] %v271
          %288 = vst [vmem:[#allocation2 + $0x78] sm:$0xff] %v271
        $region44: #{tpu_custom_call.1} parent=31 // pred_fallthru
          _
        %v289 = vld [vmem:[#allocation2] sm:$0xff]
        %v290 = vld [vmem:[#allocation2 + $0x8] sm:$0xff]
        %v291 = vld [vmem:[#allocation2 + $0x10] sm:$0xff]
        %v292 = vld [vmem:[#allocation2 + $0x18] sm:$0xff]
        %v293 = vld [vmem:[#allocation2 + $0x20] sm:$0xff]
        %v294 = vld [vmem:[#allocation2 + $0x28] sm:$0xff]
        %v295 = vld [vmem:[#allocation2 + $0x30] sm:$0xff]
        %v296 = vld [vmem:[#allocation2 + $0x38] sm:$0xff]
        %v297 = vld [vmem:[#allocation2 + $0x40] sm:$0xff]
        %v298 = vld [vmem:[#allocation2 + $0x48] sm:$0xff]
        %v299 = vld [vmem:[#allocation2 + $0x50] sm:$0xff]
        %v300 = vld [vmem:[#allocation2 + $0x58] sm:$0xff]
        %v301 = vld [vmem:[#allocation2 + $0x60] sm:$0xff]
        %v302 = vld [vmem:[#allocation2 + $0x68] sm:$0xff]
        %v303 = vld [vmem:[#allocation2 + $0x70] sm:$0xff]
        %v304 = vld [vmem:[#allocation2 + $0x78] sm:$0xff]
        %v305 = vld [vmem:[#allocation3] sm:$0xff]
        %v306 = vld [vmem:[#allocation3 + $0x8] sm:$0xff]
        %v307 = vld [vmem:[#allocation3 + $0x10] sm:$0xff]
        %v308 = vld [vmem:[#allocation3 + $0x18] sm:$0xff]
        %v309 = vld [vmem:[#allocation3 + $0x20] sm:$0xff]
        %v310 = vld [vmem:[#allocation3 + $0x28] sm:$0xff]
        %v311 = vld [vmem:[#allocation3 + $0x30] sm:$0xff]
        %v312 = vld [vmem:[#allocation3 + $0x38] sm:$0xff]
        %v313 = vld [vmem:[#allocation3 + $0x40] sm:$0xff]
        %v314 = vld [vmem:[#allocation3 + $0x48] sm:$0xff]
        %v315 = vld [vmem:[#allocation3 + $0x50] sm:$0xff]
        %v316 = vld [vmem:[#allocation3 + $0x58] sm:$0xff]
        %v317 = vld [vmem:[#allocation3 + $0x60] sm:$0xff]
        %v318 = vld [vmem:[#allocation3 + $0x68] sm:$0xff]
        %v319 = vld [vmem:[#allocation3 + $0x70] sm:$0xff]
        %v320 = vld [vmem:[#allocation3 + $0x78] sm:$0xff]
        %v321 = vld [vmem:[#allocation3 + $0x80] sm:$0xff]
        %v322 = vld [vmem:[#allocation3 + $0x88] sm:$0xff]
        %v323 = vld [vmem:[#allocation3 + $0x90] sm:$0xff]
        %v324 = vld [vmem:[#allocation3 + $0x98] sm:$0xff]
        %v325 = vld [vmem:[#allocation3 + $0xa0] sm:$0xff]
        %v326 = vld [vmem:[#allocation3 + $0xa8] sm:$0xff]
        %v327 = vld [vmem:[#allocation3 + $0xb0] sm:$0xff]
        %v328 = vld [vmem:[#allocation3 + $0xb8] sm:$0xff]
        %v329 = vld [vmem:[#allocation3 + $0xc0] sm:$0xff]
        %v330 = vld [vmem:[#allocation3 + $0xc8] sm:$0xff]
        %v331 = vld [vmem:[#allocation3 + $0xd0] sm:$0xff]
        %v332 = vld [vmem:[#allocation3 + $0xd8] sm:$0xff]
        %v333 = vld [vmem:[#allocation3 + $0xe0] sm:$0xff]
        %v334 = vld [vmem:[#allocation3 + $0xe8] sm:$0xff]
        %v335 = vld [vmem:[#allocation3 + $0xf0] sm:$0xff]
        %v336 = vld [vmem:[#allocation3 + $0xf8] sm:$0xff]
        %v337 = vld [vmem:[%s228] sm:$0xff]
        %v338 = vld [vmem:[%s228 + $0x8] sm:$0xff]
        %v339 = vld [vmem:[%s228 + $0x10] sm:$0xff]
        %v340 = vld [vmem:[%s228 + $0x18] sm:$0xff]
        %v341 = vld [vmem:[%s228 + $0x20] sm:$0xff]
        %v342 = vld [vmem:[%s228 + $0x28] sm:$0xff]
        %v343 = vld [vmem:[%s228 + $0x30] sm:$0xff]
        %v344 = vld [vmem:[%s228 + $0x38] sm:$0xff]
        %v345 = vld [vmem:[%s228 + $0x40] sm:$0xff]
        %v346 = vld [vmem:[%s228 + $0x48] sm:$0xff]
        %v347 = vld [vmem:[%s228 + $0x50] sm:$0xff]
        %v348 = vld [vmem:[%s228 + $0x58] sm:$0xff]
        %v349 = vld [vmem:[%s228 + $0x60] sm:$0xff]
        %v350 = vld [vmem:[%s228 + $0x68] sm:$0xff]
        %v351 = vld [vmem:[%s228 + $0x70] sm:$0xff]
        %v352 = vld [vmem:[%s228 + $0x78] sm:$0xff]
        %v353 = vld [vmem:[%s228 + $0x80] sm:$0xff]
        %v354 = vld [vmem:[%s228 + $0x88] sm:$0xff]
        %v355 = vld [vmem:[%s228 + $0x90] sm:$0xff]
        %v356 = vld [vmem:[%s228 + $0x98] sm:$0xff]
        %v357 = vld [vmem:[%s228 + $0xa0] sm:$0xff]
        %v358 = vld [vmem:[%s228 + $0xa8] sm:$0xff]
        %v359 = vld [vmem:[%s228 + $0xb0] sm:$0xff]
        %v360 = vld [vmem:[%s228 + $0xb8] sm:$0xff]
        %v361 = vld [vmem:[%s228 + $0xc0] sm:$0xff]
        %v362 = vld [vmem:[%s228 + $0xc8] sm:$0xff]
        %v363 = vld [vmem:[%s228 + $0xd0] sm:$0xff]
        %v364 = vld [vmem:[%s228 + $0xd8] sm:$0xff]
        %v365 = vld [vmem:[%s228 + $0xe0] sm:$0xff]
        %v366 = vld [vmem:[%s228 + $0xe8] sm:$0xff]
        %v367 = vld [vmem:[%s228 + $0xf0] sm:$0xff]
        %v368 = vld [vmem:[%s228 + $0xf8] sm:$0xff]
        %369 = vmatprep.subr.mxu0 %v368
        %370 = vmatpush1.xpose.msra.mxu0 %v367
        %371 = vmatprep.subr.mxu0 %v366
        %372 = vmatpush1.xpose.msra.mxu0 %v365
        %373 = vmatprep.subr.mxu0 %v364
        %374 = vmatpush1.xpose.msra.mxu0 %v363
        %375 = vmatprep.subr.mxu0 %v362
        %376 = vmatpush1.xpose.msra.mxu0 %v361
        %377 = vmatprep.subr.mxu0 %v360
        %378 = vmatpush1.xpose.msra.mxu0 %v359
        %379 = vmatprep.subr.mxu0 %v358
        %380 = vmatpush1.xpose.msra.mxu0 %v357
        %381 = vmatprep.subr.mxu0 %v356
        %382 = vmatpush1.xpose.msra.mxu0 %v355
        %383 = vmatprep.subr.mxu0 %v354
        %384 = vmatpush1.xpose.msra.mxu0 %v353
        %385 = vmatprep.subr.mxu0 %v352
        %386 = vmatpush1.xpose.msra.mxu0 %v351
        %387 = vmatprep.subr.mxu0 %v350
        %388 = vmatpush1.xpose.msra.mxu0 %v349
        %389 = vmatprep.subr.mxu0 %v348
        %390 = vmatpush1.xpose.msra.mxu0 %v347
        %391 = vmatprep.subr.mxu0 %v346
        %392 = vmatpush1.xpose.msra.mxu0 %v345
        %393 = vmatprep.subr.mxu0 %v344
        %394 = vmatpush1.xpose.msra.mxu0 %v343
        %395 = vmatprep.subr.mxu0 %v342
        %396 = vmatpush1.xpose.msra.mxu0 %v341
        %397 = vmatprep.subr.mxu0 %v340
        %398 = vmatpush1.xpose.msra.mxu0 %v339
        %399 = vmatprep.subr.mxu0 %v338
        %400 = vmatpush1.xpose.msra.mxu0 %v337
        %401 = vmatprep.subr.mxu0 0.0
        %402 = vmatpush2.xpose.msra.mxu0 0.0
        %403 = vmatprep.subr.mxu0 0.0
        %404 = vmatpush2.xpose.msra.mxu0 0.0
        %405 = vmatprep.subr.mxu0 0.0
        %406 = vmatpush2.xpose.msra.mxu0 0.0
        %407 = vmatprep.subr.mxu0 0.0
        %408 = vmatpush2.xpose.msra.mxu0 0.0
        %409 = vmatprep.subr.mxu0 0.0
        %410 = vmatpush2.xpose.msra.mxu0 0.0
        %411 = vmatprep.subr.mxu0 0.0
        %412 = vmatpush2.xpose.msra.mxu0 0.0
        %413 = vmatprep.subr.mxu0 0.0
        %414 = vmatpush2.xpose.msra.mxu0 0.0
        %415 = vmatprep.subr.mxu0 0.0
        %416 = vmatpush2.xpose.msra.mxu0 0.0
        %417 = vmatprep.subr.mxu0 0.0
        %418 = vmatpush2.xpose.msra.mxu0 0.0
        %419 = vmatprep.subr.mxu0 0.0
        %420 = vmatpush2.xpose.msra.mxu0 0.0
        %421 = vmatprep.subr.mxu0 0.0
        %422 = vmatpush2.xpose.msra.mxu0 0.0
        %423 = vmatprep.subr.mxu0 0.0
        %424 = vmatpush2.xpose.msra.mxu0 0.0
        %425 = vmatprep.subr.mxu0 0.0
        %426 = vmatpush2.xpose.msra.mxu0 0.0
        %427 = vmatprep.subr.mxu0 0.0
        %428 = vmatpush2.xpose.msra.mxu0 0.0
        %429 = vmatprep.subr.mxu0 0.0
        %430 = vmatpush2.xpose.msra.mxu0 0.0
        %431 = vmatprep.subr.mxu0 0.0
        %432 = vmatpush2.xpose.msra.mxu0 0.0
        %433 = vmatprep.mubr.f32.mxu0 %v306
        %434 = vmatmul.mubr.f32.gmra.mxu0 %v305
        %v435 = vpop.f32.mrf.mxu0
        %v436 = vadd.f32 0.0, %v435
        %v437 = vpop.f32.mrf.mxu0
        %438 = vmatprep.mubr.f32.mxu0 %v308
        %439 = vmatmul.mubr.f32.gmra.mxu0 %v307
        %v440 = vpop.f32.mrf.mxu0
        %v441 = vadd.f32 0.0, %v440
        %v442 = vpop.f32.mrf.mxu0
        %443 = vmatprep.mubr.f32.mxu0 %v310
        %444 = vmatmul.mubr.f32.gmra.mxu0 %v309
        %v445 = vpop.f32.mrf.mxu0
        %v446 = vadd.f32 0.0, %v445
        %v447 = vpop.f32.mrf.mxu0
        %448 = vmatprep.mubr.f32.mxu0 %v312
        %449 = vmatmul.mubr.f32.gmra.mxu0 %v311
        %v450 = vpop.f32.mrf.mxu0
        %v451 = vadd.f32 0.0, %v450
        %v452 = vpop.f32.mrf.mxu0
        %453 = vmatprep.mubr.f32.mxu0 %v314
        %454 = vmatmul.mubr.f32.gmra.mxu0 %v313
        %v455 = vpop.f32.mrf.mxu0
        %v456 = vadd.f32 0.0, %v455
        %v457 = vpop.f32.mrf.mxu0
        %458 = vmatprep.mubr.f32.mxu0 %v316
        %459 = vmatmul.mubr.f32.gmra.mxu0 %v315
        %v460 = vpop.f32.mrf.mxu0
        %v461 = vadd.f32 0.0, %v460
        %v462 = vpop.f32.mrf.mxu0
        %463 = vmatprep.mubr.f32.mxu0 %v318
        %464 = vmatmul.mubr.f32.gmra.mxu0 %v317
        %v465 = vpop.f32.mrf.mxu0
        %v466 = vadd.f32 0.0, %v465
        %v467 = vpop.f32.mrf.mxu0
        %468 = vmatprep.mubr.f32.mxu0 %v320
        %469 = vmatmul.mubr.f32.gmra.mxu0 %v319
        %v470 = vpop.f32.mrf.mxu0
        %v471 = vadd.f32 0.0, %v470
        %v472 = vpop.f32.mrf.mxu0
        %473 = vmatprep.mubr.f32.mxu0 %v322
        %474 = vmatmul.mubr.f32.gmra.mxu0 %v321
        %v475 = vpop.f32.mrf.mxu0
        %v476 = vadd.f32 0.0, %v475
        %v477 = vpop.f32.mrf.mxu0
        %478 = vmatprep.mubr.f32.mxu0 %v324
        %479 = vmatmul.mubr.f32.gmra.mxu0 %v323
        %v480 = vpop.f32.mrf.mxu0
        %v481 = vadd.f32 0.0, %v480
        %v482 = vpop.f32.mrf.mxu0
        %483 = vmatprep.mubr.f32.mxu0 %v326
        %484 = vmatmul.mubr.f32.gmra.mxu0 %v325
        %v485 = vpop.f32.mrf.mxu0
        %v486 = vadd.f32 0.0, %v485
        %v487 = vpop.f32.mrf.mxu0
        %488 = vmatprep.mubr.f32.mxu0 %v328
        %489 = vmatmul.mubr.f32.gmra.mxu0 %v327
        %v490 = vpop.f32.mrf.mxu0
        %v491 = vadd.f32 0.0, %v490
        %v492 = vpop.f32.mrf.mxu0
        %493 = vmatprep.mubr.f32.mxu0 %v330
        %494 = vmatmul.mubr.f32.gmra.mxu0 %v329
        %v495 = vpop.f32.mrf.mxu0
        %v496 = vadd.f32 0.0, %v495
        %v497 = vpop.f32.mrf.mxu0
        %498 = vmatprep.mubr.f32.mxu0 %v332
        %499 = vmatmul.mubr.f32.gmra.mxu0 %v331
        %v500 = vpop.f32.mrf.mxu0
        %v501 = vadd.f32 0.0, %v500
        %v502 = vpop.f32.mrf.mxu0
        %503 = vmatprep.mubr.f32.mxu0 %v334
        %504 = vmatmul.mubr.f32.gmra.mxu0 %v333
        %v505 = vpop.f32.mrf.mxu0
        %v506 = vadd.f32 0.0, %v505
        %v507 = vpop.f32.mrf.mxu0
        %508 = vmatprep.mubr.f32.mxu0 %v336
        %509 = vmatmul.mubr.f32.gmra.mxu0 %v335
        %v510 = vpop.f32.mrf.mxu0
        %v511 = vadd.f32 0.0, %v510
        %v512 = vpop.f32.mrf.mxu0
        %513 = vdwg.mxu0
        %v514 = vadd.f32 %v289, %v436
        %v515 = vadd.f32 %v290, %v441
        %v516 = vadd.f32 %v291, %v446
        %v517 = vadd.f32 %v292, %v451
        %v518 = vadd.f32 %v293, %v456
        %v519 = vadd.f32 %v294, %v461
        %v520 = vadd.f32 %v295, %v466
        %v521 = vadd.f32 %v296, %v471
        %v522 = vadd.f32 %v297, %v476
        %v523 = vadd.f32 %v298, %v481
        %v524 = vadd.f32 %v299, %v486
        %v525 = vadd.f32 %v300, %v491
        %v526 = vadd.f32 %v301, %v496
        %v527 = vadd.f32 %v302, %v501
        %v528 = vadd.f32 %v303, %v506
        %v529 = vadd.f32 %v304, %v511
        %530 = vst [vmem:[#allocation2] sm:$0xff] %v514
        %531 = vst [vmem:[#allocation2 + $0x8] sm:$0xff] %v515
        %532 = vst [vmem:[#allocation2 + $0x10] sm:$0xff] %v516
        %533 = vst [vmem:[#allocation2 + $0x18] sm:$0xff] %v517
        %534 = vst [vmem:[#allocation2 + $0x20] sm:$0xff] %v518
        %535 = vst [vmem:[#allocation2 + $0x28] sm:$0xff] %v519
        %536 = vst [vmem:[#allocation2 + $0x30] sm:$0xff] %v520
        %537 = vst [vmem:[#allocation2 + $0x38] sm:$0xff] %v521
        %538 = vst [vmem:[#allocation2 + $0x40] sm:$0xff] %v522
        %539 = vst [vmem:[#allocation2 + $0x48] sm:$0xff] %v523
        %540 = vst [vmem:[#allocation2 + $0x50] sm:$0xff] %v524
        %541 = vst [vmem:[#allocation2 + $0x58] sm:$0xff] %v525
        %542 = vst [vmem:[#allocation2 + $0x60] sm:$0xff] %v526
        %543 = vst [vmem:[#allocation2 + $0x68] sm:$0xff] %v527
        %544 = vst [vmem:[#allocation2 + $0x70] sm:$0xff] %v528
        %545 = vst [vmem:[#allocation2 + $0x78] sm:$0xff] %v529
        // Predicated region
        $region45: #{tpu_custom_call.1} parent=31 // pred_check
          %p546 = pneg %p262
        $region46: #{tpu_custom_call.1} parent=31 // pred_check_branch
          %548 = sbr.rel (%p546) target = $region48
        $region47: #{tpu_custom_call.1} parent=31 // pred_region
          %v549 = vld [vmem:[#allocation2] sm:$0xff]
          %v550 = vld [vmem:[#allocation2 + $0x8] sm:$0xff]
          %v551 = vld [vmem:[#allocation2 + $0x10] sm:$0xff]
          %v552 = vld [vmem:[#allocation2 + $0x18] sm:$0xff]
          %v553 = vld [vmem:[#allocation2 + $0x20] sm:$0xff]
          %v554 = vld [vmem:[#allocation2 + $0x28] sm:$0xff]
          %v555 = vld [vmem:[#allocation2 + $0x30] sm:$0xff]
          %v556 = vld [vmem:[#allocation2 + $0x38] sm:$0xff]
          %v557 = vld [vmem:[#allocation2 + $0x40] sm:$0xff]
          %v558 = vld [vmem:[#allocation2 + $0x48] sm:$0xff]
          %v559 = vld [vmem:[#allocation2 + $0x50] sm:$0xff]
          %v560 = vld [vmem:[#allocation2 + $0x58] sm:$0xff]
          %v561 = vld [vmem:[#allocation2 + $0x60] sm:$0xff]
          %v562 = vld [vmem:[#allocation2 + $0x68] sm:$0xff]
          %v563 = vld [vmem:[#allocation2 + $0x70] sm:$0xff]
          %v564 = vld [vmem:[#allocation2 + $0x78] sm:$0xff]
          %565 = vst [vmem:[%s253] sm:$0xff] %v549
          %566 = vst [vmem:[%s253 + $0x8] sm:$0xff] %v550
          %567 = vst [vmem:[%s253 + $0x10] sm:$0xff] %v551
          %568 = vst [vmem:[%s253 + $0x18] sm:$0xff] %v552
          %569 = vst [vmem:[%s253 + $0x20] sm:$0xff] %v553
          %570 = vst [vmem:[%s253 + $0x28] sm:$0xff] %v554
          %571 = vst [vmem:[%s253 + $0x30] sm:$0xff] %v555
          %572 = vst [vmem:[%s253 + $0x38] sm:$0xff] %v556
          %573 = vst [vmem:[%s253 + $0x40] sm:$0xff] %v557
          %574 = vst [vmem:[%s253 + $0x48] sm:$0xff] %v558
          %575 = vst [vmem:[%s253 + $0x50] sm:$0xff] %v559
          %576 = vst [vmem:[%s253 + $0x58] sm:$0xff] %v560
          %577 = vst [vmem:[%s253 + $0x60] sm:$0xff] %v561
          %578 = vst [vmem:[%s253 + $0x68] sm:$0xff] %v562
          %579 = vst [vmem:[%s253 + $0x70] sm:$0xff] %v563
          %580 = vst [vmem:[%s253 + $0x78] sm:$0xff] %v564
        $region48: #{tpu_custom_call.1} parent=31 // pred_fallthru
          _
        %s581 = sand.u32 %s132, 1
        %s582 = scalar_lea.sflag [#allocation5], %s581
        %s583 = sand.u32 %s132, 1
        %s584 = smul.addr %s583, 128
        %s585 = scalar_lea.vmem [#allocation8], %s584
        // Predicated region
        $region49: #{tpu_custom_call.1} parent=31 // pred_check
          %p586 = pneg %p142
        $region50: #{tpu_custom_call.1} parent=31 // pred_check_branch
          %588 = sbr.rel (%p586) target = $region52
        $region51: #{tpu_custom_call.1} parent=31 // pred_region
          %s589 = smul.u32 16, %s26
          %s591 = ssub.s32 2048, 2048
          %592 = vsyncadd %s582, %s591
          %s593 = smul.addr %s589, 3
          %s594 = sadd.s32 %s27, %s593
          %s595 = smul.addr %s594, 128
          %s596 = scalar_lea.hbm %s3, %s595
          %s597 = sshll.u32 %s585, 4
          %s598 = int_to_ptr.vmem [resolvable:$true] %s597
          %603 = dma.vmem_to_hbm [thread:$0]  %s598, 2048, %s596, %s582, 128, 384, 8
        $region52: #{tpu_custom_call.1} parent=31 // pred_fallthru
          _
      $region32: #{tpu_custom_call.1} parent=5 // pred_fallthru
        _
      %p604 = scmp.le.s32.totalorder 2, %s16
      // Predicated region
      $region53: #{tpu_custom_call.1} parent=5 // pred_check
        %p605 = pneg %p604
      $region54: #{tpu_custom_call.1} parent=5 // pred_check_branch
        %607 = sbr.rel (%p605) target = $region56
      $region55: #{tpu_custom_call.1} parent=5 // pred_region
        %s608 = ssub.s32 %s16, 2
        // Predicated region
        $region57: #{tpu_custom_call.1} parent=55 // pred_check
          %p609 = pneg %p148
        $region58: #{tpu_custom_call.1} parent=55 // pred_check_branch
          %611 = sbr.rel (%p609) target = $region60
        $region59: #{tpu_custom_call.1} parent=55 // pred_region
          %s612 = sand.u32 %s133, 1
          %s613 = scalar_lea.sflag [#allocation5], %s612
          %s614 = sand.u32 %s133, 1
          %s615 = smul.addr %s614, 128
          %s616 = scalar_lea.vmem [#allocation8], %s615
          %617 = dma.done %s613, 2048
        $region60: #{tpu_custom_call.1} parent=55 // pred_fallthru
          _
      $region56: #{tpu_custom_call.1} parent=5 // pred_fallthru
        _
    $region6: #{tpu_custom_call.1} parent=1 // loop_footer
      %s20 = sadd.s32 1, %s16
    $region7: #{tpu_custom_call.1} parent=1 // loop_footer_branch
      %15 = sbr.rel target = $region3
    $region8: #{tpu_custom_call.1} parent=1 // loop_exit
      _
    %618 = vsyncpa [#allocation4], 1
    %s619 = scalar_lea.sflag [#allocation4], 1
    %620 = vsyncpa %s619, 1
    %621 = vsyncpa [#allocation7], 1
    %s622 = scalar_lea.sflag [#allocation7], 1
    %623 = vsyncpa %s622, 1
    %624 = vsyncpa [#allocation5], 1
    %s625 = scalar_lea.sflag [#allocation5], 1
    %626 = vsyncpa %s625, 1

</llo_original>
